<compile_context>
chip_gen: v7x
topology: tpu7x:2x2x1
jax: 0.10.0
libtpu: 0.0.40
codegen_flags: <defaults>
</compile_context>

<pallas_src>
import functools

import jax
import jax.numpy as jnp
from jax import lax
from jax.experimental import pallas as pl
from jax.experimental.pallas import tpu as pltpu


def _prev_ce_kernel(preds_ref, prev_ref, labels_ref, out_ref, *,
                    only_negative, n_rows):
    preds = preds_ref[...].astype(jnp.float32)   # (TN, C) current logits
    prev = prev_ref[...].astype(jnp.float32)     # (TN, C) previous-model logits
    labels = labels_ref[...]                     # (TN, 1) int32 ground-truth labels

    tn, c = preds.shape
    col_ids = lax.broadcasted_iota(jnp.int32, (tn, c), 1)

    # targets = argmax(prev_preds, -1)  (first maximal index, like torch.argmax)
    row_max = jnp.max(prev, axis=-1, keepdims=True)
    targets = jnp.min(jnp.where(prev == row_max, col_ids, c),
                      axis=-1, keepdims=True)                       # (TN, 1)

    # per-row cross entropy of `preds` against `targets`:
    #   loss_i = logsumexp(preds_i) - preds_i[target_i]
    p_max = jnp.max(preds, axis=-1, keepdims=True)
    lse = p_max + jnp.log(jnp.sum(jnp.exp(preds - p_max), axis=-1, keepdims=True))
    tgt_logit = jnp.sum(jnp.where(col_ids == targets, preds, 0.0),
                        axis=-1, keepdims=True)
    loss = lse - tgt_logit                                          # (TN, 1)

    # Mask out padded rows of the (possibly ragged) last tile.
    row_ids = pl.program_id(0) * tn + lax.broadcasted_iota(jnp.int32, (tn, 1), 0)
    valid = row_ids < n_rows
    if only_negative:
        sel = jnp.logical_and(valid, labels != targets)   # rows prev model got wrong
    else:
        sel = valid

    total = jnp.sum(jnp.where(sel, loss, 0.0))

    # Lane-dense partial output tile: lane 0 = sum(loss*mask),
    # lane 1 = sum(mask) (only needed for only_negative), rest zero.
    lane = lax.broadcasted_iota(jnp.int32, (1, 8, 128), 2)
    if only_negative:
        count = jnp.sum(jnp.where(sel, 1.0, 0.0))
        out_ref[...] = jnp.where(lane == 0, total,
                                 jnp.where(lane == 1, count, 0.0))
    else:
        # count is known statically (= N); skip the extra cross-lane reduction.
        out_ref[...] = jnp.where(lane == 0, total, 0.0)


def _pick_tile_rows(n, c, itemsize):
    # Budget ~8 MiB for the two double-buffered (TN, C) input tiles, leaving
    # generous headroom under the smallest scoped-VMEM default (16 MiB, v5e)
    # and v7x's 64 MiB physical VMEM.
    budget = 8 * 1024 * 1024
    tn = budget // (2 * 2 * max(c, 1) * itemsize)
    tn = max(16, min(1024, (tn // 16) * 16))
    # Do not use a tile taller than the (16-rounded) batch itself.
    tn = min(tn, ((n + 15) // 16) * 16)
    return tn


def prev_ce_loss(preds, prev_preds, labels, *, only_negative=False):
    """JAX/Pallas equivalent of PrevCELoss.forward."""
    if prev_preds is None:
        # NOTE: shape (1,) here vs 0-d scalar on the main path intentionally
        # mirrors the original torch module's API inconsistency.
        return jnp.array([0.0], dtype=jnp.float32)

    n, c = preds.shape
    itemsize = jnp.dtype(preds.dtype).itemsize
    tn = _pick_tile_rows(n, c, itemsize)
    num_tiles = pl.cdiv(n, tn)

    labels2d = labels.astype(jnp.int32).reshape(n, 1)

    kernel = functools.partial(_prev_ce_kernel,
                               only_negative=only_negative, n_rows=n)

    partials = pl.pallas_call(
        kernel,
        grid=(num_tiles,),
        out_shape=jax.ShapeDtypeStruct((num_tiles, 8, 128), jnp.float32),
        in_specs=[
            pl.BlockSpec((tn, c), lambda i: (i, 0)),
            pl.BlockSpec((tn, c), lambda i: (i, 0)),
            pl.BlockSpec((tn, 1), lambda i: (i, 0)),
        ],
        out_specs=pl.BlockSpec((1, 8, 128), lambda i: (i, 0, 0)),
        compiler_params=pltpu.CompilerParams(
            dimension_semantics=("parallel",),
            vmem_limit_bytes=32 * 1024 * 1024,
        ),
        cost_estimate=pl.CostEstimate(
            flops=6 * n * c,
            transcendentals=n * c + n,
            bytes_accessed=2 * n * c * itemsize + n * 4 + num_tiles * 8 * 128 * 4,
        ),
    )(preds, prev_preds, labels2d)

    total = jnp.sum(partials[:, 0, 0])
    if only_negative:
        count = jnp.sum(partials[:, 0, 1])
        # total/count is NaN when the mask selects no rows — this matches
        # torch's mean over an empty tensor; do not "fix" it.
        return total / count
    return total / n


def _reference(preds, prev_preds, labels, only_negative):
    targets = jnp.argmax(prev_preds, axis=-1)
    logp = jax.nn.log_softmax(preds.astype(jnp.float32), axis=-1)
    per_row = -jnp.take_along_axis(logp, targets[:, None], axis=-1)[:, 0]
    if only_negative:
        m = (labels != targets).astype(jnp.float32)
        return jnp.sum(per_row * m) / jnp.sum(m)
    return jnp.mean(per_row)


if __name__ == "__main__":
    key = jax.random.PRNGKey(0)
    k1, k2, k3 = jax.random.split(key, 3)

    N, C = 16, 32  # batch of 16 samples, 32 classes
    preds = jax.random.normal(k1, (N, C), dtype=jnp.float32)
    prev_preds = jax.random.normal(k2, (N, C), dtype=jnp.float32)
    labels = jax.random.randint(k3, (N,), 0, C, dtype=jnp.int32)

    # default path (only_negative=False)
    out = prev_ce_loss(preds, prev_preds, labels, only_negative=False)
    out = jax.block_until_ready(out)
    ref = _reference(preds, prev_preds, labels, only_negative=False)
    assert jnp.allclose(out, ref, rtol=1e-5, atol=1e-5), (out, ref)

    # only_negative path
    out_neg = prev_ce_loss(preds, prev_preds, labels, only_negative=True)
    out_neg = jax.block_until_ready(out_neg)
    ref_neg = _reference(preds, prev_preds, labels, only_negative=True)
    assert jnp.allclose(out_neg, ref_neg, rtol=1e-5, atol=1e-5), (out_neg, ref_neg)

    # bf16 inputs (halves HBM traffic; math stays f32 in-kernel)
    out_bf16 = prev_ce_loss(preds.astype(jnp.bfloat16),
                            prev_preds.astype(jnp.bfloat16),
                            labels, only_negative=False)
    out_bf16 = jax.block_until_ready(out_bf16)
    ref_bf16 = _reference(preds.astype(jnp.bfloat16).astype(jnp.float32),
                          prev_preds.astype(jnp.bfloat16).astype(jnp.float32),
                          labels, only_negative=False)
    assert jnp.allclose(out_bf16, ref_bf16, rtol=2e-2, atol=2e-2), (out_bf16, ref_bf16)

    # prev_preds is None path
    zero = jax.block_until_ready(prev_ce_loss(preds, None, labels))
    assert zero.shape == (1,) and float(zero[0]) == 0.0

    print("KERNEL_OK")
</pallas_src>

<mosaic_0001>
module attributes {stable_mosaic.version = 11 : i64} {
  func.func @_prev_ce_kernel(%arg0: i32, %arg1: memref<16x32xf32, #tpu.memory_space<vmem>>, %arg2: memref<16x32xf32, #tpu.memory_space<vmem>>, %arg3: memref<16x1xi32, #tpu.memory_space<vmem>>, %arg4: memref<1x8x128xf32, #tpu.memory_space<vmem>>) attributes {dimension_semantics = [#tpu.dimension_semantics<parallel>], iteration_bounds = array<i64: 1>, scalar_prefetch = 0 : i64, scratch_operands = 0 : i64, tpu.core_type = #tpu.core_type<tc>, window_params = [{transform_indices = @transform_0, window_bounds = array<i64: 16, 32>}, {transform_indices = @transform_1, window_bounds = array<i64: 16, 32>}, {transform_indices = @transform_2, window_bounds = array<i64: 16, 1>}, {transform_indices = @transform_3, window_bounds = array<i64: 1, 8, 128>}]} {
    %c0 = arith.constant 0 : index
    %c0_0 = arith.constant 0 : index
    %0 = vector.load %arg1[%c0, %c0_0] : memref<16x32xf32, #tpu.memory_space<vmem>>, vector<16x32xf32>
    %c0_1 = arith.constant 0 : index
    %c0_2 = arith.constant 0 : index
    %1 = vector.load %arg2[%c0_1, %c0_2] : memref<16x32xf32, #tpu.memory_space<vmem>>, vector<16x32xf32>
    %2 = tpu.iota {dimensions = array<i32: 1>} : vector<16x32xi32>
    %cst = arith.constant dense<0xFF800000> : vector<16xf32>
    %3 = vector.multi_reduction <maximumf>, %1, %cst [1] : vector<16x32xf32> to vector<16xf32>
    %4 = vector.shape_cast %3 : vector<16xf32> to vector<16x1xf32>
    %5 = vector.broadcast %4 : vector<16x1xf32> to vector<16x32xf32>
    %6 = arith.cmpf oeq, %1, %5 : vector<16x32xf32>
    %c32_i32 = arith.constant 32 : i32
    %7 = vector.broadcast %c32_i32 : i32 to vector<16x32xi32>
    %8 = arith.select %6, %2, %7 : vector<16x32xi1>, vector<16x32xi32>
    %cst_3 = arith.constant dense<2147483647> : vector<16xi32>
    %9 = vector.multi_reduction <minsi>, %8, %cst_3 [1] : vector<16x32xi32> to vector<16xi32>
    %10 = vector.shape_cast %9 : vector<16xi32> to vector<16x1xi32>
    %cst_4 = arith.constant dense<0xFF800000> : vector<16xf32>
    %11 = vector.multi_reduction <maximumf>, %0, %cst_4 [1] : vector<16x32xf32> to vector<16xf32>
    %12 = vector.shape_cast %11 : vector<16xf32> to vector<16x1xf32>
    %13 = vector.broadcast %12 : vector<16x1xf32> to vector<16x32xf32>
    %14 = arith.subf %0, %13 : vector<16x32xf32>
    %15 = math.exp %14 : vector<16x32xf32>
    %cst_5 = arith.constant dense<0.000000e+00> : vector<16xf32>
    %16 = vector.multi_reduction <add>, %15, %cst_5 [1] : vector<16x32xf32> to vector<16xf32>
    %17 = vector.shape_cast %16 : vector<16xf32> to vector<16x1xf32>
    %18 = math.log %17 : vector<16x1xf32>
    %19 = arith.addf %12, %18 : vector<16x1xf32>
    %20 = vector.broadcast %10 : vector<16x1xi32> to vector<16x32xi32>
    %21 = arith.cmpi eq, %2, %20 : vector<16x32xi32>
    %cst_6 = arith.constant 0.000000e+00 : f32
    %22 = vector.broadcast %cst_6 : f32 to vector<16x32xf32>
    %23 = arith.select %21, %0, %22 : vector<16x32xi1>, vector<16x32xf32>
    %cst_7 = arith.constant dense<0.000000e+00> : vector<16xf32>
    %24 = vector.multi_reduction <add>, %23, %cst_7 [1] : vector<16x32xf32> to vector<16xf32>
    %25 = vector.shape_cast %24 : vector<16xf32> to vector<16x1xf32>
    %26 = arith.subf %19, %25 : vector<16x1xf32>
    %c16_i32 = arith.constant 16 : i32
    %27 = arith.muli %arg0, %c16_i32 : i32
    %28 = tpu.iota {dimensions = array<i32: 0>} : vector<16x1xi32>
    %29 = vector.broadcast %27 : i32 to vector<16x1xi32>
    %30 = arith.addi %29, %28 : vector<16x1xi32>
    %c16_i32_8 = arith.constant 16 : i32
    %31 = vector.broadcast %c16_i32_8 : i32 to vector<16x1xi32>
    %32 = arith.cmpi slt, %30, %31 : vector<16x1xi32>
    %cst_9 = arith.constant 0.000000e+00 : f32
    %33 = vector.broadcast %cst_9 : f32 to vector<16x1xf32>
    %34 = arith.select %32, %26, %33 : vector<16x1xi1>, vector<16x1xf32>
    %35 = vector.shape_cast %34 : vector<16x1xf32> to vector<1x16x1xf32>
    %cst_10 = arith.constant dense<0.000000e+00> : vector<1xf32>
    %36 = vector.multi_reduction <add>, %35, %cst_10 [1, 2] : vector<1x16x1xf32> to vector<1xf32>
    %37 = vector.shape_cast %36 : vector<1xf32> to vector<1x1x1xf32>
    %38 = vector.extract %37[0, 0, 0] : f32 from vector<1x1x1xf32>
    %39 = tpu.iota {dimensions = array<i32: 2>} : vector<1x8x128xi32>
    %c0_i32 = arith.constant 0 : i32
    %40 = vector.broadcast %c0_i32 : i32 to vector<1x8x128xi32>
    %41 = arith.cmpi eq, %39, %40 : vector<1x8x128xi32>
    %cst_11 = arith.constant 0.000000e+00 : f32
    %42 = vector.broadcast %38 : f32 to vector<1x8x128xf32>
    %43 = vector.broadcast %cst_11 : f32 to vector<1x8x128xf32>
    %44 = arith.select %41, %42, %43 : vector<1x8x128xi1>, vector<1x8x128xf32>
    %c0_12 = arith.constant 0 : index
    %c0_13 = arith.constant 0 : index
    %c0_14 = arith.constant 0 : index
    %45 = vector.load %arg4[%c0_12, %c0_13, %c0_14] : memref<1x8x128xf32, #tpu.memory_space<vmem>>, vector<1x8x128xf32>
    tpu.vector_store %arg4[%c0_12, %c0_13, %c0_14], %44 {strides = array<i32>} : memref<1x8x128xf32, #tpu.memory_space<vmem>>, vector<1x8x128xf32>,
    return
  }
  func.func @transform_0(%arg0: i32) -> (i32, i32) {
    %c0_i32 = arith.constant 0 : i32
    %c0_i32_0 = arith.constant 0 : i32
    return %arg0, %c0_i32 : i32, i32
  }
  func.func @transform_1(%arg0: i32) -> (i32, i32) {
    %c0_i32 = arith.constant 0 : i32
    %c0_i32_0 = arith.constant 0 : i32
    return %arg0, %c0_i32 : i32, i32
  }
  func.func @transform_2(%arg0: i32) -> (i32, i32) {
    %c0_i32 = arith.constant 0 : i32
    %c0_i32_0 = arith.constant 0 : i32
    return %arg0, %c0_i32 : i32, i32
  }
  func.func @transform_3(%arg0: i32) -> (i32, i32, i32) {
    %c0_i32 = arith.constant 0 : i32
    %c0_i32_0 = arith.constant 0 : i32
    %c0_i32_1 = arith.constant 0 : i32
    return %arg0, %c0_i32, %c0_i32_0 : i32, i32, i32
  }
}

</mosaic_0001>

<llo_original>
// kernel: tpu_custom_call.1
$region0: #{tpu_custom_call.1}
  #allocation0 [shape = 'u32[]', space=smem, size = 0x4, offset = 0x4, fixed_abs, tag = 'smem constant byte address 0x4 - core index']
  #allocation1 [shape = 'u32[144,128]{1,0:T(1,128)}', space=vmem, size = 0x12000, scoped, tag = 'internal scratch']
  %s0 = inlined_call_operand.vmem [shape: f32[16,32], index: 0, kind: input, shape index: {}]
  %s1 = inlined_call_operand.hbm [shape: f32[16,32], index: 1, kind: input, shape index: {}]
  %s2 = inlined_call_operand.vmem [shape: s32[16,1], index: 2, kind: input, shape index: {}]
  %s3 = inlined_call_operand.hbm [shape: f32[1,8,128], index: 3, kind: output, shape index: {}]
  %s4 = sld [smem:[#allocation0]]
  $region26: #{tpu_custom_call.1} parent=0
    _
  %s6 = ssub.s32 1, %s4
  %s7 = scalar_select 0, %s6, %s4
  $region1: #{tpu_custom_call.1} parent=0
    #allocation2 [shape = 'u8[8192]{0}', space=vmem, size = 0x2000, scoped, tag = 'input window, operand 1, single buffered']
    #allocation3 [shape = 's32[1]{0}', space=sflag, size = 0x4, scoped, tag = 'scoped memory for tpu_custom_call.1']
    #allocation4 [shape = 's32[1]{0}', space=sflag, size = 0x4, scoped, tag = 'scoped memory for tpu_custom_call.1']
    #allocation5 [shape = 'u8[4096]{0}', space=vmem, size = 0x1000, scoped, tag = 'output window, operand 0, single buffered']
    %8 = vsyncpa [#allocation3], 0
    %9 = vsyncpa [#allocation4], 0
    // Predicated region
    $region2: #{tpu_custom_call.1} parent=1 // pred_check
      _
    $region3: #{tpu_custom_call.1} parent=1 // pred_check_branch
      %11 = sbr.rel (0) target = $region5
    $region4: #{tpu_custom_call.1} parent=1 // pred_region
      _
    $region5: #{tpu_custom_call.1} parent=1 // pred_fallthru
      _
    // Predicated region
    $region6: #{tpu_custom_call.1} parent=1 // pred_check
      _
    $region7: #{tpu_custom_call.1} parent=1 // pred_check_branch
      %13 = sbr.rel (0) target = $region9
    $region8: #{tpu_custom_call.1} parent=1 // pred_region
      %s15 = ssub.s32 256, 256
      %16 = vsyncadd [#allocation3], %s15
      %s17 = sshll.u32 [#allocation2], 4
      %s18 = int_to_ptr.vmem [resolvable:$true] %s17
      %23 = dma.hbm_to_vmem [thread:$0]  %s1, 256, %s18, [#allocation3], 128, 128, 8
    $region9: #{tpu_custom_call.1} parent=1 // pred_fallthru
      _
    // Predicated region
    $region10: #{tpu_custom_call.1} parent=1 // pred_check
      _
    $region11: #{tpu_custom_call.1} parent=1 // pred_check_branch
      %25 = sbr.rel (0) target = $region13
    $region12: #{tpu_custom_call.1} parent=1 // pred_region
      _
    $region13: #{tpu_custom_call.1} parent=1 // pred_fallthru
      _
    // Predicated region
    $region14: #{tpu_custom_call.1} parent=1 // pred_check
      _
    $region15: #{tpu_custom_call.1} parent=1 // pred_check_branch
      %27 = sbr.rel (0) target = $region17
    $region16: #{tpu_custom_call.1} parent=1 // pred_region
      %28 = dma.done [#allocation3], 256
    $region17: #{tpu_custom_call.1} parent=1 // pred_fallthru
      _
    %v29 = vld [vmem:[%s0] sm:$0xff]
    %v30 = vld [vmem:[%s0 + $0x8] sm:$0xff]
    %v31 = vld [vmem:[#allocation2] sm:$0xff]
    %v32 = vld [vmem:[#allocation2 + $0x8] sm:$0xff]
    %v33 = vlaneseq
    %v34 = vand.u32 %v33, 127
    %vm35 = vcmask 261120
    %v36 = vsel %vm35, %v31, -inf
    %37 = vmax.xlane.f32.xlu0 %v36
    %v38 = vpop.xlane.xlu0 %37
    %v39 = vsel %vm35, %v32, -inf
    %40 = vmax.xlane.f32.xlu0 %v39
    %v41 = vpop.xlane.xlu0 %40
    %vm42 = vcmp.eq.f32.partialorder %v31, %v38
    %vm43 = vcmp.eq.f32.partialorder %v32, %v41
    %v44 = vsel %vm42, %v34, 32
    %v45 = vsel %vm43, %v34, 32
    %v46 = vsel %vm35, %v44, 2147483647
    %v47 = vand.u32 %v46, 65535
    %v48 = vshra.s32 %v46, 16
    %v49 = vcvt.s32.f32 %v47
    %v50 = vcvt.s32.f32 %v48
    %51 = vmin.xlane.f32.xlu0 %v50
    %v52 = vpop.xlane.xlu0 %51
    %vm53 = vcmp.eq.f32.partialorder %v50, %v52
    %v54 = vsel %vm53, %v49, inf
    %55 = vmin.xlane.f32.xlu0 %v54
    %v56 = vpop.xlane.xlu0 %55
    %v57 = vcvt.f32.s32 %v56
    %v58 = vcvt.f32.s32 %v52
    %v59 = vshll.u32 %v58, 16
    %v60 = vadd.s32 %v59, %v57
    %v61 = vsel %vm35, %v45, 2147483647
    %v62 = vand.u32 %v61, 65535
    %v63 = vshra.s32 %v61, 16
    %v64 = vcvt.s32.f32 %v62
    %v65 = vcvt.s32.f32 %v63
    %66 = vmin.xlane.f32.xlu0 %v65
    %v67 = vpop.xlane.xlu0 %66
    %vm68 = vcmp.eq.f32.partialorder %v65, %v67
    %v69 = vsel %vm68, %v64, inf
    %70 = vmin.xlane.f32.xlu0 %v69
    %v71 = vpop.xlane.xlu0 %70
    %v72 = vcvt.f32.s32 %v71
    %v73 = vcvt.f32.s32 %v67
    %v74 = vshll.u32 %v73, 16
    %v75 = vadd.s32 %v74, %v72
    %v76 = vsel %vm35, %v29, -inf
    %77 = vmax.xlane.f32.xlu0 %v76
    %v78 = vpop.xlane.xlu0 %77
    %v79 = vsel %vm35, %v30, -inf
    %80 = vmax.xlane.f32.xlu0 %v79
    %v81 = vpop.xlane.xlu0 %80
    %v82 = vsub.f32 %v29, %v78
    %v83 = vsub.f32 %v30, %v81
    %v84 = vmul.f32 %v82, 1.442695
    %v85 = vpow.pop %v84
    %v86 = vmul.f32 %v83, 1.442695
    %v87 = vpow.pop %v86
    %v88 = vsel %vm35, %v85, 0.0
    %89 = vadd.xlane.f32.xlu0 %v88
    %v90 = vpop.xlane.xlu0 %89
    %v91 = vsel %vm35, %v87, 0.0
    %92 = vadd.xlane.f32.xlu0 %v91
    %v93 = vpop.xlane.xlu0 %92
    %v94 = vlog2.pop %v90
    %v95 = vmul.f32 %v94, 0.6931472
    %v96 = vlog2.pop %v93
    %v97 = vmul.f32 %v96, 0.6931472
    %v98 = vadd.f32 %v78, %v95
    %v99 = vadd.f32 %v81, %v97
    %vm100 = vcmp.eq.s32.totalorder %v34, %v60
    %vm101 = vcmp.eq.s32.totalorder %v34, %v75
    %v102 = vsel %vm100, %v29, 0.0
    %v103 = vsel %vm101, %v30, 0.0
    %v104 = vsel %vm35, %v102, 0.0
    %105 = vadd.xlane.f32.xlu0 %v104
    %v106 = vpop.xlane.xlu0 %105
    %v107 = vsel %vm35, %v103, 0.0
    %108 = vadd.xlane.f32.xlu0 %v107
    %v109 = vpop.xlane.xlu0 %108
    %v110 = vsub.f32 %v98, %v106
    %v111 = vsub.f32 %v99, %v109
    %s112 = smul.u32 0, 16
    %v113 = vlaneseq
    %v114 = vshrl.u32 %v113, 7
    %v115 = vadd.s32 %v114, 8
    %v116 = vstv %s112
    %v117 = vadd.s32 %v116, %v114
    %v118 = vadd.s32 %v116, %v115
    %vm119 = vcmp.lt.s32.totalorder %v117, 16
    %vm120 = vcmp.lt.s32.totalorder %v118, 16
    %v121 = vsel %vm119, %v110, 0.0
    %v122 = vsel %vm120, %v111, 0.0
    %vm123 = vcmask 7168
    %v124 = vsel %vm123, %v121, 0.0
    %v125 = vsel %vm123, %v122, 0.0
    %v126 = vadd.f32 %v124, %v125
    %127 = vadd.xlane.f32.xlu0 %v126
    %v128 = vpop.xlane.xlu0 %127
    %v129 = vrot.slane %v128, 4
    %v130 = vadd.f32 %v128, %v129
    %v131 = vrot.slane %v130, 2
    %v132 = vadd.f32 %v130, %v131
    %v133 = vrot.slane %v132, 1
    %v134 = vadd.f32 %v132, %v133
    %s135 = vtos %v134
    %vm136 = vcmp.eq.s32.totalorder %v34, 0
    %v137 = vstv %s135
    %v138 = vsel %vm136, %v137, 0.0
    %139 = vst [vmem:[#allocation5] sm:$0xff] %v138
    // Predicated region
    $region18: #{tpu_custom_call.1} parent=1 // pred_check
      _
    $region19: #{tpu_custom_call.1} parent=1 // pred_check_branch
      %141 = sbr.rel (0) target = $region21
    $region20: #{tpu_custom_call.1} parent=1 // pred_region
      %s143 = ssub.s32 128, 128
      %144 = vsyncadd [#allocation4], %s143
      %s146 = sshll.u32 [#allocation5], 4
      %s147 = int_to_ptr.vmem [resolvable:$true] %s146
      %149 = dma.vmem_to_hbm [thread:$0]  %s147, 128, %s3, [#allocation4]
    $region21: #{tpu_custom_call.1} parent=1 // pred_fallthru
      _
    // Predicated region
    $region22: #{tpu_custom_call.1} parent=1 // pred_check
      _
    $region23: #{tpu_custom_call.1} parent=1 // pred_check_branch
      %151 = sbr.rel (0) target = $region25
    $region24: #{tpu_custom_call.1} parent=1 // pred_region
      %152 = dma.done [#allocation4], 128
    $region25: #{tpu_custom_call.1} parent=1 // pred_fallthru
      _
    %153 = vsyncpa [#allocation3], 1
    %154 = vsyncpa [#allocation4], 1

</llo_original>
